<compile_context>
chip_gen: v6e
topology: v6e:2x2x1
jax: 0.10.0
libtpu: 0.0.40
codegen_flags: <defaults>
</compile_context>

<pallas_src>
import functools

import jax
import jax.numpy as jnp
import numpy as np
from jax.experimental import pallas as pl
from jax.experimental.pallas import tpu as pltpu

# ---------------- model hyper-params (small, demo sized) ----------------
VOCAB_SIZE = 32          # rows of word_out_emb
SUBWORDS_SIZE = 64       # rows of word_in_emb
DIMENSION = 32           # embedding dim
SUBWORD_MAX = 8          # subwords per target word
NUM_SAMPLES = 6          # pos + neg samples per target
BATCH = 16

LANE = 128               # TPU vreg lane width (K dims and D padded to this)
SUBLANE = 8              # sublane multiple (samples axis padded to this)

# padding_idx in the PyTorch module; nn.init.uniform_ overwrites that row, so
# the forward pass is a plain embedding lookup and padding_idx has no effect.
MAX_SUBWORD_VOCAB_SIZE = SUBWORDS_SIZE - 1


def _round_up(x, m):
    return (x + m - 1) // m * m


# ---------------------------- Pallas kernel ------------------------------
def sisg_kernel(targets_ref, subwords_ref, invlen_ref, samples_ref,
                in_emb_ref, out_embT_ref, out_ref):
    t = targets_ref[...]          # (TB, 1)        int32
    sw = subwords_ref[...]        # (TB, SW)       int32
    inv_ln = invlen_ref[...]      # (TB, 1)        f32   (1 / subword_length)
    smp = samples_ref[...]        # (TB, S_pad)    int32 (padded with id 0)
    w_in = in_emb_ref[...]        # (SUBp, Dp)     f32   (zero-padded rows/cols)
    w_outT = out_embT_ref[...]    # (Dp, Vp)       f32   (pre-transposed, padded)

    sub_pad = w_in.shape[0]
    v_pad = w_outT.shape[1]

    # ---- fused embedding gather: single (TB, SUBp) @ (SUBp, Dp) matmul -----
    # word_emb + subword_emb/len  ==  (onehot(t) + counts(sw) * 1/len) @ W_in
    sub_iota = jax.lax.broadcasted_iota(jnp.int32, (1, sub_pad), 1)       # (1, SUBp)
    onehot_t = (t == sub_iota).astype(jnp.float32)                        # (TB, SUBp)
    sub_iota3 = jax.lax.broadcasted_iota(jnp.int32, (1, 1, sub_pad), 2)   # (1,1,SUBp)
    counts = jnp.sum((sw[:, :, None] == sub_iota3).astype(jnp.float32),
                     axis=1)                                              # (TB, SUBp)
    combined = onehot_t + counts * inv_ln                                 # (TB, SUBp)
    emb = jnp.dot(combined, w_in,
                  preferred_element_type=jnp.float32)                     # (TB, Dp)

    # ---- score every vocab word with one tiny matmul, then one-hot select --
    # (small-V path: O(TB*Vp) scores; see production TODO at the top)
    all_scores = jnp.dot(emb, w_outT,
                         preferred_element_type=jnp.float32)              # (TB, Vp)
    v_iota3 = jax.lax.broadcasted_iota(jnp.int32, (1, 1, v_pad), 2)       # (1,1,Vp)
    sel = (smp[:, :, None] == v_iota3).astype(jnp.float32)                # (TB,S_pad,Vp)
    score = jnp.sum(sel * all_scores[:, None, :], axis=-1)                # (TB, S_pad)

    out_ref[...] = jax.nn.sigmoid(score)


# ------------------------------ wrapper -----------------------------------
@functools.partial(jax.jit, static_argnames=("tile_b",))
def sisg_forward(targets, subwords, subword_length, samples, w_in, w_out,
                 *, tile_b=None):
    b = targets.shape[0]
    swm = subwords.shape[1]
    s = samples.shape[1]
    sub, d = w_in.shape
    v, _ = w_out.shape

    if tile_b is None:
        tile_b = b                      # one grid step at demo scale
    assert b % tile_b == 0

    d_pad = _round_up(d, LANE)                     # lane-align embedding dim
    sub_pad = _round_up(sub, LANE)                 # lane-align subword vocab (K dim)
    v_pad = _round_up(v, LANE)                     # lane-align vocab (N dim)
    s_pad = _round_up(max(s, SUBLANE), SUBLANE)    # compute padding only (8)

    targets2 = targets.reshape(b, 1).astype(jnp.int32)
    inv_len2 = (1.0 / subword_length.astype(jnp.float32)).reshape(b, 1)
    subwords2 = subwords.astype(jnp.int32)
    # NOTE: padded sample columns reuse id 0; their (deterministic) scores are
    # discarded by the wrapper slice below.  Out-of-range indices map to a
    # zero one-hot row (score 0 -> sigmoid 0.5), not an OOB error.
    samples2 = jnp.pad(samples.astype(jnp.int32), ((0, 0), (0, s_pad - s)))
    w_in_p = jnp.pad(w_in.astype(jnp.float32),
                     ((0, sub_pad - sub), (0, d_pad - d)))                # (SUBp, Dp)
    w_outT_p = jnp.pad(w_out.astype(jnp.float32).T,
                       ((0, d_pad - d), (0, v_pad - v)))                  # (Dp, Vp)

    grid = (b // tile_b,)
    out = pl.pallas_call(
        sisg_kernel,
        out_shape=jax.ShapeDtypeStruct((b, s_pad), jnp.float32),
        grid_spec=pltpu.PrefetchScalarGridSpec(
            num_scalar_prefetch=0,
            grid=grid,
            in_specs=[
                pl.BlockSpec((tile_b, 1), lambda i: (i, 0)),        # targets
                pl.BlockSpec((tile_b, swm), lambda i: (i, 0)),      # subwords
                pl.BlockSpec((tile_b, 1), lambda i: (i, 0)),        # 1/subword_length
                pl.BlockSpec((tile_b, s_pad), lambda i: (i, 0)),    # samples (padded)
                pl.BlockSpec((sub_pad, d_pad), lambda i: (0, 0)),   # word_in_emb
                pl.BlockSpec((d_pad, v_pad), lambda i: (0, 0)),     # word_out_emb^T
            ],
            out_specs=pl.BlockSpec((tile_b, s_pad), lambda i: (i, 0)),
        ),
        compiler_params=pltpu.CompilerParams(
            dimension_semantics=("parallel",),
            vmem_limit_bytes=32 * 1024 * 1024),
    )(targets2, subwords2, inv_len2, samples2, w_in_p, w_outT_p)
    return out[:, :s]                   # drop the sublane padding of the output


# --------------------------- pure-JAX reference ----------------------------
def sisg_reference(targets, subwords, subword_length, samples, w_in, w_out):
    word_emb = w_in[targets]                                  # (B, D)
    sub_emb = w_in[subwords].sum(axis=1) / subword_length[:, None]
    emb = word_emb + sub_emb                                  # (B, D)
    pos_neg = w_out[samples]                                  # (B, S, D)
    score = jnp.einsum("bsd,bd->bs", pos_neg, emb)
    return jax.nn.sigmoid(score)


if __name__ == "__main__":
    key = jax.random.PRNGKey(0)
    k_in, k_out, k_t, k_sw, k_len, k_smp = jax.random.split(key, 6)

    # nn.init.uniform_(word_in_emb.weight, -1/300, 1/300)
    w_in = jax.random.uniform(k_in, (SUBWORDS_SIZE, DIMENSION),
                              dtype=jnp.float32, minval=-1 / 300, maxval=1 / 300)
    # The PyTorch module zero-inits word_out_emb (all scores exactly 0, sigmoid
    # 0.5); use small random values here so the check exercises the score path.
    w_out = jax.random.uniform(k_out, (VOCAB_SIZE, DIMENSION),
                               dtype=jnp.float32, minval=-0.5, maxval=0.5)

    targets = jax.random.randint(k_t, (BATCH,), 0, SUBWORDS_SIZE, dtype=jnp.int32)
    subwords = jax.random.randint(k_sw, (BATCH, SUBWORD_MAX), 0, SUBWORDS_SIZE,
                                  dtype=jnp.int32)
    subword_length = jax.random.randint(k_len, (BATCH,), 1, SUBWORD_MAX + 1,
                                        dtype=jnp.int32).astype(jnp.float32)
    samples = jax.random.randint(k_smp, (BATCH, NUM_SAMPLES), 0, VOCAB_SIZE,
                                 dtype=jnp.int32)

    predict = sisg_forward(targets, subwords, subword_length, samples, w_in, w_out)
    predict = jax.block_until_ready(predict)

    expected = sisg_reference(targets, subwords, subword_length, samples, w_in, w_out)
    np.testing.assert_allclose(np.asarray(predict), np.asarray(expected),
                               rtol=1e-5, atol=1e-6)
    print("KERNEL_OK")
</pallas_src>

<mosaic_0001>
module attributes {stable_mosaic.version = 11 : i64} {
  func.func @sisg_kernel(%arg0: i32, %arg1: memref<16x1xi32, #tpu.memory_space<vmem>>, %arg2: memref<16x8xi32, #tpu.memory_space<vmem>>, %arg3: memref<16x1xf32, #tpu.memory_space<vmem>>, %arg4: memref<16x8xi32, #tpu.memory_space<vmem>>, %arg5: memref<128x128xf32, #tpu.memory_space<vmem>>, %arg6: memref<128x128xf32, #tpu.memory_space<vmem>>, %arg7: memref<16x8xf32, #tpu.memory_space<vmem>>) attributes {dimension_semantics = [#tpu.dimension_semantics<parallel>], iteration_bounds = array<i64: 1>, scalar_prefetch = 0 : i64, scratch_operands = 0 : i64, tpu.core_type = #tpu.core_type<tc>, window_params = [{transform_indices = @transform_0, window_bounds = array<i64: 16, 1>}, {transform_indices = @transform_1, window_bounds = array<i64: 16, 8>}, {transform_indices = @transform_2, window_bounds = array<i64: 16, 1>}, {transform_indices = @transform_3, window_bounds = array<i64: 16, 8>}, {pipeline_mode = #tpu.pipeline_mode<synchronous>, transform_indices = @transform_4, window_bounds = array<i64: 128, 128>}, {pipeline_mode = #tpu.pipeline_mode<synchronous>, transform_indices = @transform_5, window_bounds = array<i64: 128, 128>}, {transform_indices = @transform_6, window_bounds = array<i64: 16, 8>}]} {
    %c0 = arith.constant 0 : index
    %c0_0 = arith.constant 0 : index
    %0 = vector.load %arg1[%c0, %c0_0] : memref<16x1xi32, #tpu.memory_space<vmem>>, vector<16x1xi32>
    %c0_1 = arith.constant 0 : index
    %c0_2 = arith.constant 0 : index
    %1 = vector.load %arg2[%c0_1, %c0_2] : memref<16x8xi32, #tpu.memory_space<vmem>>, vector<16x8xi32>
    %c0_3 = arith.constant 0 : index
    %c0_4 = arith.constant 0 : index
    %2 = vector.load %arg3[%c0_3, %c0_4] : memref<16x1xf32, #tpu.memory_space<vmem>>, vector<16x1xf32>
    %c0_5 = arith.constant 0 : index
    %c0_6 = arith.constant 0 : index
    %3 = vector.load %arg4[%c0_5, %c0_6] : memref<16x8xi32, #tpu.memory_space<vmem>>, vector<16x8xi32>
    %c0_7 = arith.constant 0 : index
    %c0_8 = arith.constant 0 : index
    %4 = vector.load %arg5[%c0_7, %c0_8] : memref<128x128xf32, #tpu.memory_space<vmem>>, vector<128x128xf32>
    %c0_9 = arith.constant 0 : index
    %c0_10 = arith.constant 0 : index
    %5 = vector.load %arg6[%c0_9, %c0_10] : memref<128x128xf32, #tpu.memory_space<vmem>>, vector<128x128xf32>
    %6 = tpu.iota {dimensions = array<i32: 1>} : vector<1x128xi32>
    %7 = vector.broadcast %0 : vector<16x1xi32> to vector<16x128xi32>
    %8 = vector.broadcast %6 : vector<1x128xi32> to vector<16x128xi32>
    %9 = arith.cmpi eq, %7, %8 : vector<16x128xi32>
    %10 = arith.extui %9 : vector<16x128xi1> to vector<16x128xi32>
    %11 = arith.sitofp %10 : vector<16x128xi32> to vector<16x128xf32>
    %12 = tpu.iota {dimensions = array<i32: 2>} : vector<1x1x128xi32>
    %13 = vector.shape_cast %1 : vector<16x8xi32> to vector<16x8x1xi32>
    %14 = vector.broadcast %13 : vector<16x8x1xi32> to vector<16x8x128xi32>
    %15 = vector.broadcast %12 : vector<1x1x128xi32> to vector<16x8x128xi32>
    %16 = arith.cmpi eq, %14, %15 : vector<16x8x128xi32>
    %17 = arith.extui %16 : vector<16x8x128xi1> to vector<16x8x128xi32>
    %18 = arith.sitofp %17 : vector<16x8x128xi32> to vector<16x8x128xf32>
    %cst = arith.constant dense<0.000000e+00> : vector<16x128xf32>
    %19 = vector.multi_reduction <add>, %18, %cst [1] : vector<16x8x128xf32> to vector<16x128xf32>
    %20 = vector.broadcast %2 : vector<16x1xf32> to vector<16x128xf32>
    %21 = arith.mulf %19, %20 : vector<16x128xf32>
    %22 = arith.addf %11, %21 : vector<16x128xf32>
    %cst_11 = arith.constant dense<0.000000e+00> : vector<16x128xf32>
    %23 = tpu.matmul %22, %4, %cst_11 {dimension_numbers = #tpu.dot_dimension_numbers<[1], [0], [0], [1], [0, 0, 1, 1], [], []>} : vector<16x128xf32>, vector<128x128xf32>, vector<16x128xf32> -> vector<16x128xf32>
    %cst_12 = arith.constant dense<0.000000e+00> : vector<16x128xf32>
    %24 = tpu.matmul %23, %5, %cst_12 {dimension_numbers = #tpu.dot_dimension_numbers<[1], [0], [0], [1], [0, 0, 1, 1], [], []>} : vector<16x128xf32>, vector<128x128xf32>, vector<16x128xf32> -> vector<16x128xf32>
    %25 = tpu.iota {dimensions = array<i32: 2>} : vector<1x1x128xi32>
    %26 = vector.shape_cast %3 : vector<16x8xi32> to vector<16x8x1xi32>
    %27 = vector.broadcast %26 : vector<16x8x1xi32> to vector<16x8x128xi32>
    %28 = vector.broadcast %25 : vector<1x1x128xi32> to vector<16x8x128xi32>
    %29 = arith.cmpi eq, %27, %28 : vector<16x8x128xi32>
    %30 = arith.extui %29 : vector<16x8x128xi1> to vector<16x8x128xi32>
    %31 = arith.sitofp %30 : vector<16x8x128xi32> to vector<16x8x128xf32>
    %32 = vector.shape_cast %24 : vector<16x128xf32> to vector<16x1x128xf32>
    %33 = vector.broadcast %32 : vector<16x1x128xf32> to vector<16x8x128xf32>
    %34 = arith.mulf %31, %33 : vector<16x8x128xf32>
    %cst_13 = arith.constant dense<0.000000e+00> : vector<16x8xf32>
    %35 = vector.multi_reduction <add>, %34, %cst_13 [2] : vector<16x8x128xf32> to vector<16x8xf32>
    %36 = arith.negf %35 : vector<16x8xf32>
    %37 = math.exp %36 : vector<16x8xf32>
    %cst_14 = arith.constant 1.000000e+00 : f32
    %38 = vector.broadcast %cst_14 : f32 to vector<16x8xf32>
    %39 = arith.addf %38, %37 : vector<16x8xf32>
    %40 = arith.divf %38, %39 : vector<16x8xf32>
    %c0_15 = arith.constant 0 : index
    %c0_16 = arith.constant 0 : index
    %41 = vector.load %arg7[%c0_15, %c0_16] : memref<16x8xf32, #tpu.memory_space<vmem>>, vector<16x8xf32>
    tpu.vector_store %arg7[%c0_15, %c0_16], %40 {strides = array<i32>} : memref<16x8xf32, #tpu.memory_space<vmem>>, vector<16x8xf32>,
    return
  }
  func.func @transform_0(%arg0: i32) -> (i32, i32) {
    %c0_i32 = arith.constant 0 : i32
    %c0_i32_0 = arith.constant 0 : i32
    return %arg0, %c0_i32 : i32, i32
  }
  func.func @transform_1(%arg0: i32) -> (i32, i32) {
    %c0_i32 = arith.constant 0 : i32
    %c0_i32_0 = arith.constant 0 : i32
    return %arg0, %c0_i32 : i32, i32
  }
  func.func @transform_2(%arg0: i32) -> (i32, i32) {
    %c0_i32 = arith.constant 0 : i32
    %c0_i32_0 = arith.constant 0 : i32
    return %arg0, %c0_i32 : i32, i32
  }
  func.func @transform_3(%arg0: i32) -> (i32, i32) {
    %c0_i32 = arith.constant 0 : i32
    %c0_i32_0 = arith.constant 0 : i32
    return %arg0, %c0_i32 : i32, i32
  }
  func.func @transform_4(%arg0: i32) -> (i32, i32) {
    %c0_i32 = arith.constant 0 : i32
    %c0_i32_0 = arith.constant 0 : i32
    %c0_i32_1 = arith.constant 0 : i32
    return %c0_i32, %c0_i32_0 : i32, i32
  }
  func.func @transform_5(%arg0: i32) -> (i32, i32) {
    %c0_i32 = arith.constant 0 : i32
    %c0_i32_0 = arith.constant 0 : i32
    %c0_i32_1 = arith.constant 0 : i32
    return %c0_i32, %c0_i32_0 : i32, i32
  }
  func.func @transform_6(%arg0: i32) -> (i32, i32) {
    %c0_i32 = arith.constant 0 : i32
    %c0_i32_0 = arith.constant 0 : i32
    return %arg0, %c0_i32 : i32, i32
  }
}

</mosaic_0001>

<llo_original>
// kernel: sisg_forward.1
$region0: #{sisg_forward.1}
  #allocation0 [shape = 'u32[]', space=smem, size = 0x4, offset = 0x4, fixed_abs, tag = 'smem constant byte address 0x4 - core index']
  #allocation1 [shape = 'u32[144,128]{1,0:T(1,128)}', space=vmem, size = 0x12000, scoped, tag = 'internal scratch']
  %s0 = inlined_call_operand.vmem [shape: s32[16,1], index: 0, kind: input, shape index: {}]
  %s1 = inlined_call_operand.vmem [shape: s32[16,8], index: 1, kind: input, shape index: {}]
  %s2 = inlined_call_operand.vmem [shape: f32[16,1], index: 2, kind: input, shape index: {}]
  %s3 = inlined_call_operand.vmem [shape: s32[16,8], index: 3, kind: input, shape index: {}]
  %s4 = inlined_call_operand.vmem [shape: f32[128,128], index: 4, kind: input, shape index: {}]
  %s5 = inlined_call_operand.vmem [shape: f32[128,128], index: 5, kind: input, shape index: {}]
  %s6 = inlined_call_operand.vmem [shape: f32[16,8], index: 6, kind: output, shape index: {}]
  %s7 = sld [smem:[#allocation0]]
  $region34: #{sisg_forward.1} parent=0
    _
  %s9 = ssub.s32 1, %s7
  %s10 = scalar_select 0, %s9, %s7
  // Predicated region
  $region2: #{sisg_forward.1} parent=0 // pred_check
    _
  $region3: #{sisg_forward.1} parent=0 // pred_check_branch
    %12 = sbr.rel (0) target = $region5
  $region4: #{sisg_forward.1} parent=0 // pred_region
    _
  $region5: #{sisg_forward.1} parent=0 // pred_fallthru
    _
  // Predicated region
  $region6: #{sisg_forward.1} parent=0 // pred_check
    _
  $region7: #{sisg_forward.1} parent=0 // pred_check_branch
    %14 = sbr.rel (0) target = $region9
  $region8: #{sisg_forward.1} parent=0 // pred_region
    _
  $region9: #{sisg_forward.1} parent=0 // pred_fallthru
    _
  // Predicated region
  $region10: #{sisg_forward.1} parent=0 // pred_check
    _
  $region11: #{sisg_forward.1} parent=0 // pred_check_branch
    %16 = sbr.rel (0) target = $region13
  $region12: #{sisg_forward.1} parent=0 // pred_region
    _
  $region13: #{sisg_forward.1} parent=0 // pred_fallthru
    _
  // Predicated region
  $region14: #{sisg_forward.1} parent=0 // pred_check
    _
  $region15: #{sisg_forward.1} parent=0 // pred_check_branch
    %18 = sbr.rel (0) target = $region17
  $region16: #{sisg_forward.1} parent=0 // pred_region
    _
  $region17: #{sisg_forward.1} parent=0 // pred_fallthru
    _
  // Predicated region
  $region18: #{sisg_forward.1} parent=0 // pred_check
    _
  $region19: #{sisg_forward.1} parent=0 // pred_check_branch
    %20 = sbr.rel (0) target = $region21
  $region20: #{sisg_forward.1} parent=0 // pred_region
    _
  $region21: #{sisg_forward.1} parent=0 // pred_fallthru
    _
  // Predicated region
  $region22: #{sisg_forward.1} parent=0 // pred_check
    _
  $region23: #{sisg_forward.1} parent=0 // pred_check_branch
    %22 = sbr.rel (0) target = $region25
  $region24: #{sisg_forward.1} parent=0 // pred_region
    _
  $region25: #{sisg_forward.1} parent=0 // pred_fallthru
    _
  %v23 = vld [vmem:[%s0] sm:$0xff]
  %v24 = vld [vmem:[%s0 + $0x8] sm:$0xff]
  %v25 = vld [vmem:[%s1] sm:$0xff]
  %v26 = vld [vmem:[%s1 + $0x8] sm:$0xff]
  %v27 = vld [vmem:[%s2] sm:$0xff]
  %v28 = vld [vmem:[%s2 + $0x8] sm:$0xff]
  %v29 = vld [vmem:[%s3] sm:$0xff]
  %v30 = vld [vmem:[%s3 + $0x8] sm:$0xff]
  %v31 = vld [vmem:[%s4] sm:$0xff]
  %v32 = vld [vmem:[%s4 + $0x8] sm:$0xff]
  %v33 = vld [vmem:[%s4 + $0x10] sm:$0xff]
  %v34 = vld [vmem:[%s4 + $0x18] sm:$0xff]
  %v35 = vld [vmem:[%s4 + $0x20] sm:$0xff]
  %v36 = vld [vmem:[%s4 + $0x28] sm:$0xff]
  %v37 = vld [vmem:[%s4 + $0x30] sm:$0xff]
  %v38 = vld [vmem:[%s4 + $0x38] sm:$0xff]
  %v39 = vld [vmem:[%s4 + $0x40] sm:$0xff]
  %v40 = vld [vmem:[%s4 + $0x48] sm:$0xff]
  %v41 = vld [vmem:[%s4 + $0x50] sm:$0xff]
  %v42 = vld [vmem:[%s4 + $0x58] sm:$0xff]
  %v43 = vld [vmem:[%s4 + $0x60] sm:$0xff]
  %v44 = vld [vmem:[%s4 + $0x68] sm:$0xff]
  %v45 = vld [vmem:[%s4 + $0x70] sm:$0xff]
  %v46 = vld [vmem:[%s4 + $0x78] sm:$0xff]
  %v47 = vld [vmem:[%s5] sm:$0xff]
  %v48 = vld [vmem:[%s5 + $0x8] sm:$0xff]
  %v49 = vld [vmem:[%s5 + $0x10] sm:$0xff]
  %v50 = vld [vmem:[%s5 + $0x18] sm:$0xff]
  %v51 = vld [vmem:[%s5 + $0x20] sm:$0xff]
  %v52 = vld [vmem:[%s5 + $0x28] sm:$0xff]
  %v53 = vld [vmem:[%s5 + $0x30] sm:$0xff]
  %v54 = vld [vmem:[%s5 + $0x38] sm:$0xff]
  %v55 = vld [vmem:[%s5 + $0x40] sm:$0xff]
  %v56 = vld [vmem:[%s5 + $0x48] sm:$0xff]
  %v57 = vld [vmem:[%s5 + $0x50] sm:$0xff]
  %v58 = vld [vmem:[%s5 + $0x58] sm:$0xff]
  %v59 = vld [vmem:[%s5 + $0x60] sm:$0xff]
  %v60 = vld [vmem:[%s5 + $0x68] sm:$0xff]
  %v61 = vld [vmem:[%s5 + $0x70] sm:$0xff]
  %v62 = vld [vmem:[%s5 + $0x78] sm:$0xff]
  %v63 = vlaneseq
  %v64 = vand.u32 %v63, 127
  %65 = vset.pattern.permute.xlu0 0
  %66 = vperm.xlu0 %65, %v23
  %v67 = vpop.permute.xlu0 %66
  %68 = vset.pattern.permute.xlu0 0
  %69 = vperm.xlu0 %68, %v24
  %v70 = vpop.permute.xlu0 %69
  %vm71 = vcmp.eq.s32.totalorder %v67, %v64
  %vm72 = vcmp.eq.s32.totalorder %v70, %v64
  %v73 = vsel %vm71, 1, 0
  %v74 = vsel %vm72, 1, 0
  %v75 = vcvt.s32.f32 %v73
  %v76 = vcvt.s32.f32 %v74
  %v77 = vlaneseq
  %v78 = vshrl.u32 %v77, 7
  %v79 = vsub.s32 0, %v78
  %v80 = vrot.slane %v25, %v79
  %82 = vbcast.lane.b32.xlu0 %v80, 256
  %v83 = vpop.permute.xlu0 %82
  %v84 = vlaneseq
  %v85 = vshrl.u32 %v84, 7
  %v86 = vsub.s32 1, %v85
  %v87 = vrot.slane %v25, %v86
  %89 = vbcast.lane.b32.xlu0 %v87, 256
  %v90 = vpop.permute.xlu0 %89
  %v91 = vlaneseq
  %v92 = vshrl.u32 %v91, 7
  %v93 = vsub.s32 2, %v92
  %v94 = vrot.slane %v25, %v93
  %96 = vbcast.lane.b32.xlu0 %v94, 256
  %v97 = vpop.permute.xlu0 %96
  %v98 = vlaneseq
  %v99 = vshrl.u32 %v98, 7
  %v100 = vsub.s32 3, %v99
  %v101 = vrot.slane %v25, %v100
  %103 = vbcast.lane.b32.xlu0 %v101, 256
  %v104 = vpop.permute.xlu0 %103
  %v105 = vlaneseq
  %v106 = vshrl.u32 %v105, 7
  %v107 = vsub.s32 4, %v106
  %v108 = vrot.slane %v25, %v107
  %110 = vbcast.lane.b32.xlu0 %v108, 256
  %v111 = vpop.permute.xlu0 %110
  %v112 = vlaneseq
  %v113 = vshrl.u32 %v112, 7
  %v114 = vsub.s32 5, %v113
  %v115 = vrot.slane %v25, %v114
  %117 = vbcast.lane.b32.xlu0 %v115, 256
  %v118 = vpop.permute.xlu0 %117
  %v119 = vlaneseq
  %v120 = vshrl.u32 %v119, 7
  %v121 = vsub.s32 6, %v120
  %v122 = vrot.slane %v25, %v121
  %124 = vbcast.lane.b32.xlu0 %v122, 256
  %v125 = vpop.permute.xlu0 %124
  %v126 = vlaneseq
  %v127 = vshrl.u32 %v126, 7
  %v128 = vsub.s32 7, %v127
  %v129 = vrot.slane %v25, %v128
  %131 = vbcast.lane.b32.xlu0 %v129, 256
  %v132 = vpop.permute.xlu0 %131
  %v133 = vlaneseq
  %v134 = vshrl.u32 %v133, 7
  %v135 = vsub.s32 0, %v134
  %v136 = vrot.slane %v26, %v135
  %138 = vbcast.lane.b32.xlu0 %v136, 256
  %v139 = vpop.permute.xlu0 %138
  %v140 = vlaneseq
  %v141 = vshrl.u32 %v140, 7
  %v142 = vsub.s32 1, %v141
  %v143 = vrot.slane %v26, %v142
  %145 = vbcast.lane.b32.xlu0 %v143, 256
  %v146 = vpop.permute.xlu0 %145
  %v147 = vlaneseq
  %v148 = vshrl.u32 %v147, 7
  %v149 = vsub.s32 2, %v148
  %v150 = vrot.slane %v26, %v149
  %152 = vbcast.lane.b32.xlu0 %v150, 256
  %v153 = vpop.permute.xlu0 %152
  %v154 = vlaneseq
  %v155 = vshrl.u32 %v154, 7
  %v156 = vsub.s32 3, %v155
  %v157 = vrot.slane %v26, %v156
  %159 = vbcast.lane.b32.xlu0 %v157, 256
  %v160 = vpop.permute.xlu0 %159
  %v161 = vlaneseq
  %v162 = vshrl.u32 %v161, 7
  %v163 = vsub.s32 4, %v162
  %v164 = vrot.slane %v26, %v163
  %166 = vbcast.lane.b32.xlu0 %v164, 256
  %v167 = vpop.permute.xlu0 %166
  %v168 = vlaneseq
  %v169 = vshrl.u32 %v168, 7
  %v170 = vsub.s32 5, %v169
  %v171 = vrot.slane %v26, %v170
  %173 = vbcast.lane.b32.xlu0 %v171, 256
  %v174 = vpop.permute.xlu0 %173
  %v175 = vlaneseq
  %v176 = vshrl.u32 %v175, 7
  %v177 = vsub.s32 6, %v176
  %v178 = vrot.slane %v26, %v177
  %180 = vbcast.lane.b32.xlu0 %v178, 256
  %v181 = vpop.permute.xlu0 %180
  %v182 = vlaneseq
  %v183 = vshrl.u32 %v182, 7
  %v184 = vsub.s32 7, %v183
  %v185 = vrot.slane %v26, %v184
  %187 = vbcast.lane.b32.xlu0 %v185, 256
  %v188 = vpop.permute.xlu0 %187
  %vm189 = vcmp.eq.s32.totalorder %v83, %v64
  %vm190 = vcmp.eq.s32.totalorder %v90, %v64
  %vm191 = vcmp.eq.s32.totalorder %v97, %v64
  %vm192 = vcmp.eq.s32.totalorder %v104, %v64
  %vm193 = vcmp.eq.s32.totalorder %v111, %v64
  %vm194 = vcmp.eq.s32.totalorder %v118, %v64
  %vm195 = vcmp.eq.s32.totalorder %v125, %v64
  %vm196 = vcmp.eq.s32.totalorder %v132, %v64
  %vm197 = vcmp.eq.s32.totalorder %v139, %v64
  %vm198 = vcmp.eq.s32.totalorder %v146, %v64
  %vm199 = vcmp.eq.s32.totalorder %v153, %v64
  %vm200 = vcmp.eq.s32.totalorder %v160, %v64
  %vm201 = vcmp.eq.s32.totalorder %v167, %v64
  %vm202 = vcmp.eq.s32.totalorder %v174, %v64
  %vm203 = vcmp.eq.s32.totalorder %v181, %v64
  %vm204 = vcmp.eq.s32.totalorder %v188, %v64
  %v205 = vsel %vm189, 1, 0
  %v206 = vsel %vm190, 1, 0
  %v207 = vsel %vm191, 1, 0
  %v208 = vsel %vm192, 1, 0
  %v209 = vsel %vm193, 1, 0
  %v210 = vsel %vm194, 1, 0
  %v211 = vsel %vm195, 1, 0
  %v212 = vsel %vm196, 1, 0
  %v213 = vsel %vm197, 1, 0
  %v214 = vsel %vm198, 1, 0
  %v215 = vsel %vm199, 1, 0
  %v216 = vsel %vm200, 1, 0
  %v217 = vsel %vm201, 1, 0
  %v218 = vsel %vm202, 1, 0
  %v219 = vsel %vm203, 1, 0
  %v220 = vsel %vm204, 1, 0
  %v221 = vcvt.s32.f32 %v205
  %v222 = vcvt.s32.f32 %v206
  %v223 = vcvt.s32.f32 %v207
  %v224 = vcvt.s32.f32 %v208
  %v225 = vcvt.s32.f32 %v209
  %v226 = vcvt.s32.f32 %v210
  %v227 = vcvt.s32.f32 %v211
  %v228 = vcvt.s32.f32 %v212
  %v229 = vcvt.s32.f32 %v213
  %v230 = vcvt.s32.f32 %v214
  %v231 = vcvt.s32.f32 %v215
  %v232 = vcvt.s32.f32 %v216
  %v233 = vcvt.s32.f32 %v217
  %v234 = vcvt.s32.f32 %v218
  %v235 = vcvt.s32.f32 %v219
  %v236 = vcvt.s32.f32 %v220
  %v237 = vrot.slane %v221, 4
  %v238 = vadd.f32 %v221, %v237
  %v239 = vrot.slane %v238, 2
  %v240 = vadd.f32 %v238, %v239
  %v241 = vrot.slane %v240, 1
  %v242 = vadd.f32 %v240, %v241
  %v243 = vrot.slane %v222, 4
  %v244 = vadd.f32 %v222, %v243
  %v245 = vrot.slane %v244, 2
  %v246 = vadd.f32 %v244, %v245
  %v247 = vrot.slane %v246, 1
  %v248 = vadd.f32 %v246, %v247
  %v249 = vrot.slane %v223, 4
  %v250 = vadd.f32 %v223, %v249
  %v251 = vrot.slane %v250, 2
  %v252 = vadd.f32 %v250, %v251
  %v253 = vrot.slane %v252, 1
  %v254 = vadd.f32 %v252, %v253
  %v255 = vrot.slane %v224, 4
  %v256 = vadd.f32 %v224, %v255
  %v257 = vrot.slane %v256, 2
  %v258 = vadd.f32 %v256, %v257
  %v259 = vrot.slane %v258, 1
  %v260 = vadd.f32 %v258, %v259
  %v261 = vrot.slane %v225, 4
  %v262 = vadd.f32 %v225, %v261
  %v263 = vrot.slane %v262, 2
  %v264 = vadd.f32 %v262, %v263
  %v265 = vrot.slane %v264, 1
  %v266 = vadd.f32 %v264, %v265
  %v267 = vrot.slane %v226, 4
  %v268 = vadd.f32 %v226, %v267
  %v269 = vrot.slane %v268, 2
  %v270 = vadd.f32 %v268, %v269
  %v271 = vrot.slane %v270, 1
  %v272 = vadd.f32 %v270, %v271
  %v273 = vrot.slane %v227, 4
  %v274 = vadd.f32 %v227, %v273
  %v275 = vrot.slane %v274, 2
  %v276 = vadd.f32 %v274, %v275
  %v277 = vrot.slane %v276, 1
  %v278 = vadd.f32 %v276, %v277
  %v279 = vrot.slane %v228, 4
  %v280 = vadd.f32 %v228, %v279
  %v281 = vrot.slane %v280, 2
  %v282 = vadd.f32 %v280, %v281
  %v283 = vrot.slane %v282, 1
  %v284 = vadd.f32 %v282, %v283
  %v285 = vrot.slane %v229, 4
  %v286 = vadd.f32 %v229, %v285
  %v287 = vrot.slane %v286, 2
  %v288 = vadd.f32 %v286, %v287
  %v289 = vrot.slane %v288, 1
  %v290 = vadd.f32 %v288, %v289
  %v291 = vrot.slane %v230, 4
  %v292 = vadd.f32 %v230, %v291
  %v293 = vrot.slane %v292, 2
  %v294 = vadd.f32 %v292, %v293
  %v295 = vrot.slane %v294, 1
  %v296 = vadd.f32 %v294, %v295
  %v297 = vrot.slane %v231, 4
  %v298 = vadd.f32 %v231, %v297
  %v299 = vrot.slane %v298, 2
  %v300 = vadd.f32 %v298, %v299
  %v301 = vrot.slane %v300, 1
  %v302 = vadd.f32 %v300, %v301
  %v303 = vrot.slane %v232, 4
  %v304 = vadd.f32 %v232, %v303
  %v305 = vrot.slane %v304, 2
  %v306 = vadd.f32 %v304, %v305
  %v307 = vrot.slane %v306, 1
  %v308 = vadd.f32 %v306, %v307
  %v309 = vrot.slane %v233, 4
  %v310 = vadd.f32 %v233, %v309
  %v311 = vrot.slane %v310, 2
  %v312 = vadd.f32 %v310, %v311
  %v313 = vrot.slane %v312, 1
  %v314 = vadd.f32 %v312, %v313
  %v315 = vrot.slane %v234, 4
  %v316 = vadd.f32 %v234, %v315
  %v317 = vrot.slane %v316, 2
  %v318 = vadd.f32 %v316, %v317
  %v319 = vrot.slane %v318, 1
  %v320 = vadd.f32 %v318, %v319
  %v321 = vrot.slane %v235, 4
  %v322 = vadd.f32 %v235, %v321
  %v323 = vrot.slane %v322, 2
  %v324 = vadd.f32 %v322, %v323
  %v325 = vrot.slane %v324, 1
  %v326 = vadd.f32 %v324, %v325
  %v327 = vrot.slane %v236, 4
  %v328 = vadd.f32 %v236, %v327
  %v329 = vrot.slane %v328, 2
  %v330 = vadd.f32 %v328, %v329
  %v331 = vrot.slane %v330, 1
  %v332 = vadd.f32 %v330, %v331
  %334 = vset.pattern.permute.xlu0 0
  %335 = vperm.xlu0 %334, %v27
  %v336 = vpop.permute.xlu0 %335
  %338 = vset.pattern.permute.xlu0 0
  %339 = vperm.xlu0 %338, %v28
  %v340 = vpop.permute.xlu0 %339
  %v341 = vrot.slane %v336, 1
  %v342 = vrot.slane %v336, 2
  %v343 = vrot.slane %v336, 3
  %v344 = vrot.slane %v336, 4
  %v345 = vrot.slane %v336, 5
  %v346 = vrot.slane %v336, 6
  %v347 = vrot.slane %v336, 7
  %v348 = vrot.slane %v340, 1
  %v349 = vrot.slane %v340, 2
  %v350 = vrot.slane %v340, 3
  %v351 = vrot.slane %v340, 4
  %v352 = vrot.slane %v340, 5
  %v353 = vrot.slane %v340, 6
  %v354 = vrot.slane %v340, 7
  %v371 = vmul.f32 %v242, %v336
  %v372 = vmul.f32 %v248, %v341
  %v373 = vmul.f32 %v254, %v342
  %v374 = vmul.f32 %v260, %v343
  %v375 = vmul.f32 %v266, %v344
  %v376 = vmul.f32 %v272, %v345
  %v377 = vmul.f32 %v278, %v346
  %v378 = vmul.f32 %v284, %v347
  %v379 = vmul.f32 %v290, %v340
  %v380 = vmul.f32 %v296, %v348
  %v381 = vmul.f32 %v302, %v349
  %v382 = vmul.f32 %v308, %v350
  %v383 = vmul.f32 %v314, %v351
  %v384 = vmul.f32 %v320, %v352
  %v385 = vmul.f32 %v326, %v353
  %v386 = vmul.f32 %v332, %v354
  %v403 = vrot.slane %v372, 7
  %vm404 = vcmask 1041409
  %v405 = vsel %vm404, %v403, %v371
  %v406 = vrot.slane %v373, 6
  %vm407 = vcmask 1042434
  %v408 = vsel %vm407, %v406, %v405
  %v409 = vrot.slane %v374, 5
  %vm410 = vcmask 1043459
  %v411 = vsel %vm410, %v409, %v408
  %v412 = vrot.slane %v375, 4
  %vm413 = vcmask 1044484
  %v414 = vsel %vm413, %v412, %v411
  %v415 = vrot.slane %v376, 3
  %vm416 = vcmask 1045509
  %v417 = vsel %vm416, %v415, %v414
  %v418 = vrot.slane %v377, 2
  %vm419 = vcmask 1046534
  %v420 = vsel %vm419, %v418, %v417
  %v421 = vrot.slane %v378, 1
  %vm422 = vcmask 1047559
  %v423 = vsel %vm422, %v421, %v420
  %v424 = vrot.slane %v380, 7
  %v425 = vsel %vm404, %v424, %v379
  %v426 = vrot.slane %v381, 6
  %v427 = vsel %vm407, %v426, %v425
  %v428 = vrot.slane %v382, 5
  %v429 = vsel %vm410, %v428, %v427
  %v430 = vrot.slane %v383, 4
  %v431 = vsel %vm413, %v430, %v429
  %v432 = vrot.slane %v384, 3
  %v433 = vsel %vm416, %v432, %v431
  %v434 = vrot.slane %v385, 2
  %v435 = vsel %vm419, %v434, %v433
  %v436 = vrot.slane %v386, 1
  %v437 = vsel %vm422, %v436, %v435
  %v440 = vadd.f32 %v75, %v423
  %v441 = vadd.f32 %v76, %v437
  %442 = vmatprep.subr.mxu0 0.0
  %443 = vmatpush1.msra.mxu0 %v46
  %444 = vmatprep.subr.mxu0 0.0
  %445 = vmatpush1.msra.mxu0 %v45
  %446 = vmatprep.subr.mxu0 0.0
  %447 = vmatpush1.msra.mxu0 %v44
  %448 = vmatprep.subr.mxu0 0.0
  %449 = vmatpush1.msra.mxu0 %v43
  %450 = vmatprep.subr.mxu0 0.0
  %451 = vmatpush1.msra.mxu0 %v42
  %452 = vmatprep.subr.mxu0 0.0
  %453 = vmatpush1.msra.mxu0 %v41
  %454 = vmatprep.subr.mxu0 0.0
  %455 = vmatpush1.msra.mxu0 %v40
  %456 = vmatprep.subr.mxu0 0.0
  %457 = vmatpush1.msra.mxu0 %v39
  %458 = vmatprep.subr.mxu0 0.0
  %459 = vmatpush1.msra.mxu0 %v38
  %460 = vmatprep.subr.mxu0 0.0
  %461 = vmatpush1.msra.mxu0 %v37
  %462 = vmatprep.subr.mxu0 0.0
  %463 = vmatpush1.msra.mxu0 %v36
  %464 = vmatprep.subr.mxu0 0.0
  %465 = vmatpush1.msra.mxu0 %v35
  %466 = vmatprep.subr.mxu0 0.0
  %467 = vmatpush1.msra.mxu0 %v34
  %468 = vmatprep.subr.mxu0 0.0
  %469 = vmatpush1.msra.mxu0 %v33
  %470 = vmatprep.subr.mxu0 0.0
  %471 = vmatpush1.msra.mxu0 %v32
  %472 = vmatprep.subr.mxu0 0.0
  %473 = vmatpush1.msra.mxu0 %v31
  %474 = vmatprep.subr.mxu0 0.0
  %475 = vmatpush2.msra.mxu0 0.0
  %476 = vmatprep.subr.mxu0 0.0
  %477 = vmatpush2.msra.mxu0 0.0
  %478 = vmatprep.subr.mxu0 0.0
  %479 = vmatpush2.msra.mxu0 0.0
  %480 = vmatprep.subr.mxu0 0.0
  %481 = vmatpush2.msra.mxu0 0.0
  %482 = vmatprep.subr.mxu0 0.0
  %483 = vmatpush2.msra.mxu0 0.0
  %484 = vmatprep.subr.mxu0 0.0
  %485 = vmatpush2.msra.mxu0 0.0
  %486 = vmatprep.subr.mxu0 0.0
  %487 = vmatpush2.msra.mxu0 0.0
  %488 = vmatprep.subr.mxu0 0.0
  %489 = vmatpush2.msra.mxu0 0.0
  %490 = vmatprep.subr.mxu0 0.0
  %491 = vmatpush2.msra.mxu0 0.0
  %492 = vmatprep.subr.mxu0 0.0
  %493 = vmatpush2.msra.mxu0 0.0
  %494 = vmatprep.subr.mxu0 0.0
  %495 = vmatpush2.msra.mxu0 0.0
  %496 = vmatprep.subr.mxu0 0.0
  %497 = vmatpush2.msra.mxu0 0.0
  %498 = vmatprep.subr.mxu0 0.0
  %499 = vmatpush2.msra.mxu0 0.0
  %500 = vmatprep.subr.mxu0 0.0
  %501 = vmatpush2.msra.mxu0 0.0
  %502 = vmatprep.subr.mxu0 0.0
  %503 = vmatpush2.msra.mxu0 0.0
  %504 = vmatprep.subr.mxu0 0.0
  %505 = vmatpush2.msra.mxu0 0.0
  %506 = vmatprep.mubr.f32.mxu0 0.0
  %507 = vmatmul.mubr.f32.gmra.mxu0 %v440
  %v508 = vpop.f32.mrf.mxu0
  %v509 = vadd.f32 0.0, %v508
  %v510 = vpop.f32.mrf.mxu0
  %511 = vmatprep.mubr.f32.mxu0 0.0
  %512 = vmatmul.mubr.f32.gmra.mxu0 %v441
  %v513 = vpop.f32.mrf.mxu0
  %v514 = vadd.f32 0.0, %v513
  %v515 = vpop.f32.mrf.mxu0
  %516 = vdwg.mxu0
  %517 = vmatprep.subr.mxu0 0.0
  %518 = vmatpush1.msra.mxu0 %v62
  %519 = vmatprep.subr.mxu0 0.0
  %520 = vmatpush1.msra.mxu0 %v61
  %521 = vmatprep.subr.mxu0 0.0
  %522 = vmatpush1.msra.mxu0 %v60
  %523 = vmatprep.subr.mxu0 0.0
  %524 = vmatpush1.msra.mxu0 %v59
  %525 = vmatprep.subr.mxu0 0.0
  %526 = vmatpush1.msra.mxu0 %v58
  %527 = vmatprep.subr.mxu0 0.0
  %528 = vmatpush1.msra.mxu0 %v57
  %529 = vmatprep.subr.mxu0 0.0
  %530 = vmatpush1.msra.mxu0 %v56
  %531 = vmatprep.subr.mxu0 0.0
  %532 = vmatpush1.msra.mxu0 %v55
  %533 = vmatprep.subr.mxu0 0.0
  %534 = vmatpush1.msra.mxu0 %v54
  %535 = vmatprep.subr.mxu0 0.0
  %536 = vmatpush1.msra.mxu0 %v53
  %537 = vmatprep.subr.mxu0 0.0
  %538 = vmatpush1.msra.mxu0 %v52
  %539 = vmatprep.subr.mxu0 0.0
  %540 = vmatpush1.msra.mxu0 %v51
  %541 = vmatprep.subr.mxu0 0.0
  %542 = vmatpush1.msra.mxu0 %v50
  %543 = vmatprep.subr.mxu0 0.0
  %544 = vmatpush1.msra.mxu0 %v49
  %545 = vmatprep.subr.mxu0 0.0
  %546 = vmatpush1.msra.mxu0 %v48
  %547 = vmatprep.subr.mxu0 0.0
  %548 = vmatpush1.msra.mxu0 %v47
  %549 = vmatprep.subr.mxu0 0.0
  %550 = vmatpush2.msra.mxu0 0.0
  %551 = vmatprep.subr.mxu0 0.0
  %552 = vmatpush2.msra.mxu0 0.0
  %553 = vmatprep.subr.mxu0 0.0
  %554 = vmatpush2.msra.mxu0 0.0
  %555 = vmatprep.subr.mxu0 0.0
  %556 = vmatpush2.msra.mxu0 0.0
  %557 = vmatprep.subr.mxu0 0.0
  %558 = vmatpush2.msra.mxu0 0.0
  %559 = vmatprep.subr.mxu0 0.0
  %560 = vmatpush2.msra.mxu0 0.0
  %561 = vmatprep.subr.mxu0 0.0
  %562 = vmatpush2.msra.mxu0 0.0
  %563 = vmatprep.subr.mxu0 0.0
  %564 = vmatpush2.msra.mxu0 0.0
  %565 = vmatprep.subr.mxu0 0.0
  %566 = vmatpush2.msra.mxu0 0.0
  %567 = vmatprep.subr.mxu0 0.0
  %568 = vmatpush2.msra.mxu0 0.0
  %569 = vmatprep.subr.mxu0 0.0
  %570 = vmatpush2.msra.mxu0 0.0
  %571 = vmatprep.subr.mxu0 0.0
  %572 = vmatpush2.msra.mxu0 0.0
  %573 = vmatprep.subr.mxu0 0.0
  %574 = vmatpush2.msra.mxu0 0.0
  %575 = vmatprep.subr.mxu0 0.0
  %576 = vmatpush2.msra.mxu0 0.0
  %577 = vmatprep.subr.mxu0 0.0
  %578 = vmatpush2.msra.mxu0 0.0
  %579 = vmatprep.subr.mxu0 0.0
  %580 = vmatpush2.msra.mxu0 0.0
  %581 = vmatprep.mubr.f32.mxu0 0.0
  %582 = vmatmul.mubr.f32.gmra.mxu0 %v509
  %v583 = vpop.f32.mrf.mxu0
  %v584 = vadd.f32 0.0, %v583
  %v585 = vpop.f32.mrf.mxu0
  %586 = vmatprep.mubr.f32.mxu0 0.0
  %587 = vmatmul.mubr.f32.gmra.mxu0 %v514
  %v588 = vpop.f32.mrf.mxu0
  %v589 = vadd.f32 0.0, %v588
  %v590 = vpop.f32.mrf.mxu0
  %591 = vdwg.mxu0
  %v592 = vlaneseq
  %v593 = vshrl.u32 %v592, 7
  %v594 = vsub.s32 0, %v593
  %v595 = vrot.slane %v29, %v594
  %597 = vbcast.lane.b32.xlu0 %v595, 256
  %v598 = vpop.permute.xlu0 %597
  %v599 = vlaneseq
  %v600 = vshrl.u32 %v599, 7
  %v601 = vsub.s32 1, %v600
  %v602 = vrot.slane %v29, %v601
  %604 = vbcast.lane.b32.xlu0 %v602, 256
  %v605 = vpop.permute.xlu0 %604
  %v606 = vlaneseq
  %v607 = vshrl.u32 %v606, 7
  %v608 = vsub.s32 2, %v607
  %v609 = vrot.slane %v29, %v608
  %611 = vbcast.lane.b32.xlu0 %v609, 256
  %v612 = vpop.permute.xlu0 %611
  %v613 = vlaneseq
  %v614 = vshrl.u32 %v613, 7
  %v615 = vsub.s32 3, %v614
  %v616 = vrot.slane %v29, %v615
  %618 = vbcast.lane.b32.xlu0 %v616, 256
  %v619 = vpop.permute.xlu0 %618
  %v620 = vlaneseq
  %v621 = vshrl.u32 %v620, 7
  %v622 = vsub.s32 4, %v621
  %v623 = vrot.slane %v29, %v622
  %625 = vbcast.lane.b32.xlu0 %v623, 256
  %v626 = vpop.permute.xlu0 %625
  %v627 = vlaneseq
  %v628 = vshrl.u32 %v627, 7
  %v629 = vsub.s32 5, %v628
  %v630 = vrot.slane %v29, %v629
  %632 = vbcast.lane.b32.xlu0 %v630, 256
  %v633 = vpop.permute.xlu0 %632
  %v634 = vlaneseq
  %v635 = vshrl.u32 %v634, 7
  %v636 = vsub.s32 6, %v635
  %v637 = vrot.slane %v29, %v636
  %639 = vbcast.lane.b32.xlu0 %v637, 256
  %v640 = vpop.permute.xlu0 %639
  %v641 = vlaneseq
  %v642 = vshrl.u32 %v641, 7
  %v643 = vsub.s32 7, %v642
  %v644 = vrot.slane %v29, %v643
  %646 = vbcast.lane.b32.xlu0 %v644, 256
  %v647 = vpop.permute.xlu0 %646
  %v648 = vlaneseq
  %v649 = vshrl.u32 %v648, 7
  %v650 = vsub.s32 0, %v649
  %v651 = vrot.slane %v30, %v650
  %653 = vbcast.lane.b32.xlu0 %v651, 256
  %v654 = vpop.permute.xlu0 %653
  %v655 = vlaneseq
  %v656 = vshrl.u32 %v655, 7
  %v657 = vsub.s32 1, %v656
  %v658 = vrot.slane %v30, %v657
  %660 = vbcast.lane.b32.xlu0 %v658, 256
  %v661 = vpop.permute.xlu0 %660
  %v662 = vlaneseq
  %v663 = vshrl.u32 %v662, 7
  %v664 = vsub.s32 2, %v663
  %v665 = vrot.slane %v30, %v664
  %667 = vbcast.lane.b32.xlu0 %v665, 256
  %v668 = vpop.permute.xlu0 %667
  %v669 = vlaneseq
  %v670 = vshrl.u32 %v669, 7
  %v671 = vsub.s32 3, %v670
  %v672 = vrot.slane %v30, %v671
  %674 = vbcast.lane.b32.xlu0 %v672, 256
  %v675 = vpop.permute.xlu0 %674
  %v676 = vlaneseq
  %v677 = vshrl.u32 %v676, 7
  %v678 = vsub.s32 4, %v677
  %v679 = vrot.slane %v30, %v678
  %681 = vbcast.lane.b32.xlu0 %v679, 256
  %v682 = vpop.permute.xlu0 %681
  %v683 = vlaneseq
  %v684 = vshrl.u32 %v683, 7
  %v685 = vsub.s32 5, %v684
  %v686 = vrot.slane %v30, %v685
  %688 = vbcast.lane.b32.xlu0 %v686, 256
  %v689 = vpop.permute.xlu0 %688
  %v690 = vlaneseq
  %v691 = vshrl.u32 %v690, 7
  %v692 = vsub.s32 6, %v691
  %v693 = vrot.slane %v30, %v692
  %695 = vbcast.lane.b32.xlu0 %v693, 256
  %v696 = vpop.permute.xlu0 %695
  %v697 = vlaneseq
  %v698 = vshrl.u32 %v697, 7
  %v699 = vsub.s32 7, %v698
  %v700 = vrot.slane %v30, %v699
  %702 = vbcast.lane.b32.xlu0 %v700, 256
  %v703 = vpop.permute.xlu0 %702
  %vm704 = vcmp.eq.s32.totalorder %v598, %v64
  %vm705 = vcmp.eq.s32.totalorder %v605, %v64
  %vm706 = vcmp.eq.s32.totalorder %v612, %v64
  %vm707 = vcmp.eq.s32.totalorder %v619, %v64
  %vm708 = vcmp.eq.s32.totalorder %v626, %v64
  %vm709 = vcmp.eq.s32.totalorder %v633, %v64
  %vm710 = vcmp.eq.s32.totalorder %v640, %v64
  %vm711 = vcmp.eq.s32.totalorder %v647, %v64
  %vm712 = vcmp.eq.s32.totalorder %v654, %v64
  %vm713 = vcmp.eq.s32.totalorder %v661, %v64
  %vm714 = vcmp.eq.s32.totalorder %v668, %v64
  %vm715 = vcmp.eq.s32.totalorder %v675, %v64
  %vm716 = vcmp.eq.s32.totalorder %v682, %v64
  %vm717 = vcmp.eq.s32.totalorder %v689, %v64
  %vm718 = vcmp.eq.s32.totalorder %v696, %v64
  %vm719 = vcmp.eq.s32.totalorder %v703, %v64
  %v720 = vsel %vm704, 1, 0
  %v721 = vsel %vm705, 1, 0
  %v722 = vsel %vm706, 1, 0
  %v723 = vsel %vm707, 1, 0
  %v724 = vsel %vm708, 1, 0
  %v725 = vsel %vm709, 1, 0
  %v726 = vsel %vm710, 1, 0
  %v727 = vsel %vm711, 1, 0
  %v728 = vsel %vm712, 1, 0
  %v729 = vsel %vm713, 1, 0
  %v730 = vsel %vm714, 1, 0
  %v731 = vsel %vm715, 1, 0
  %v732 = vsel %vm716, 1, 0
  %v733 = vsel %vm717, 1, 0
  %v734 = vsel %vm718, 1, 0
  %v735 = vsel %vm719, 1, 0
  %v736 = vcvt.s32.f32 %v720
  %v737 = vcvt.s32.f32 %v721
  %v738 = vcvt.s32.f32 %v722
  %v739 = vcvt.s32.f32 %v723
  %v740 = vcvt.s32.f32 %v724
  %v741 = vcvt.s32.f32 %v725
  %v742 = vcvt.s32.f32 %v726
  %v743 = vcvt.s32.f32 %v727
  %v744 = vcvt.s32.f32 %v728
  %v745 = vcvt.s32.f32 %v729
  %v746 = vcvt.s32.f32 %v730
  %v747 = vcvt.s32.f32 %v731
  %v748 = vcvt.s32.f32 %v732
  %v749 = vcvt.s32.f32 %v733
  %v750 = vcvt.s32.f32 %v734
  %v751 = vcvt.s32.f32 %v735
  %v754 = vcombine.high %v584, %v584
  %v756 = vunpack.c.l.s4 1966171168
  %v757 = vunpack.c.0.s8 %v756
  %v758 = vlaneseq
  %v759 = vshrl.u32 %v758, 7
  %v760 = vsub.s32 %v757, %v759
  %v761 = vrot.slane %v584, %v760
  %v763 = vunpack.c.l.s4 1966171168
  %v764 = vunpack.c.0.s8 %v763
  %v765 = vlaneseq
  %v766 = vshrl.u32 %v765, 7
  %v767 = vsub.s32 %v764, %v766
  %v768 = vrot.slane %v754, %v767
  %v769 = vcombine.high %v761, %v761
  %v770 = vcombine.high %v768, %v768
  %v772 = vunpack.c.l.s4 1966171168
  %v773 = vunpack.c.0.s8 %v772
  %v774 = vlaneseq
  %v775 = vshrl.u32 %v774, 7
  %v776 = vsub.s32 %v773, %v775
  %v777 = vrot.slane %v761, %v776
  %v779 = vunpack.c.l.s4 1966171168
  %v780 = vunpack.c.0.s8 %v779
  %v781 = vlaneseq
  %v782 = vshrl.u32 %v781, 7
  %v783 = vsub.s32 %v780, %v782
  %v784 = vrot.slane %v768, %v783
  %v786 = vunpack.c.l.s4 1966171168
  %v787 = vunpack.c.0.s8 %v786
  %v788 = vlaneseq
  %v789 = vshrl.u32 %v788, 7
  %v790 = vsub.s32 %v787, %v789
  %v791 = vrot.slane %v769, %v790
  %v793 = vunpack.c.l.s4 1966171168
  %v794 = vunpack.c.0.s8 %v793
  %v795 = vlaneseq
  %v796 = vshrl.u32 %v795, 7
  %v797 = vsub.s32 %v794, %v796
  %v798 = vrot.slane %v770, %v797
  %v799 = vcombine.high %v777, %v777
  %v800 = vcombine.high %v784, %v784
  %v801 = vcombine.high %v791, %v791
  %v802 = vcombine.high %v798, %v798
  %v803 = vcombine.high %v589, %v589
  %v805 = vunpack.c.l.s4 1966171168
  %v806 = vunpack.c.0.s8 %v805
  %v807 = vlaneseq
  %v808 = vshrl.u32 %v807, 7
  %v809 = vsub.s32 %v806, %v808
  %v810 = vrot.slane %v589, %v809
  %v812 = vunpack.c.l.s4 1966171168
  %v813 = vunpack.c.0.s8 %v812
  %v814 = vlaneseq
  %v815 = vshrl.u32 %v814, 7
  %v816 = vsub.s32 %v813, %v815
  %v817 = vrot.slane %v803, %v816
  %v818 = vcombine.high %v810, %v810
  %v819 = vcombine.high %v817, %v817
  %v821 = vunpack.c.l.s4 1966171168
  %v822 = vunpack.c.0.s8 %v821
  %v823 = vlaneseq
  %v824 = vshrl.u32 %v823, 7
  %v825 = vsub.s32 %v822, %v824
  %v826 = vrot.slane %v810, %v825
  %v828 = vunpack.c.l.s4 1966171168
  %v829 = vunpack.c.0.s8 %v828
  %v830 = vlaneseq
  %v831 = vshrl.u32 %v830, 7
  %v832 = vsub.s32 %v829, %v831
  %v833 = vrot.slane %v817, %v832
  %v835 = vunpack.c.l.s4 1966171168
  %v836 = vunpack.c.0.s8 %v835
  %v837 = vlaneseq
  %v838 = vshrl.u32 %v837, 7
  %v839 = vsub.s32 %v836, %v838
  %v840 = vrot.slane %v818, %v839
  %v842 = vunpack.c.l.s4 1966171168
  %v843 = vunpack.c.0.s8 %v842
  %v844 = vlaneseq
  %v845 = vshrl.u32 %v844, 7
  %v846 = vsub.s32 %v843, %v845
  %v847 = vrot.slane %v819, %v846
  %v848 = vcombine.high %v826, %v826
  %v849 = vcombine.high %v833, %v833
  %v850 = vcombine.high %v840, %v840
  %v851 = vcombine.high %v847, %v847
  %v852 = vlaneseq
  %v853 = vshrl.u32 %v852, 7
  %v854 = vsub.s32 0, %v853
  %v855 = vrot.slane %v777, %v854
  %v856 = vlaneseq
  %v857 = vshrl.u32 %v856, 7
  %v858 = vsub.s32 0, %v857
  %v859 = vrot.slane %v791, %v858
  %v860 = vlaneseq
  %v861 = vshrl.u32 %v860, 7
  %v862 = vsub.s32 0, %v861
  %v863 = vrot.slane %v799, %v862
  %v864 = vlaneseq
  %v865 = vshrl.u32 %v864, 7
  %v866 = vsub.s32 0, %v865
  %v867 = vrot.slane %v801, %v866
  %v868 = vlaneseq
  %v869 = vshrl.u32 %v868, 7
  %v870 = vsub.s32 0, %v869
  %v871 = vrot.slane %v784, %v870
  %v872 = vlaneseq
  %v873 = vshrl.u32 %v872, 7
  %v874 = vsub.s32 0, %v873
  %v875 = vrot.slane %v798, %v874
  %v876 = vlaneseq
  %v877 = vshrl.u32 %v876, 7
  %v878 = vsub.s32 0, %v877
  %v879 = vrot.slane %v800, %v878
  %v880 = vlaneseq
  %v881 = vshrl.u32 %v880, 7
  %v882 = vsub.s32 0, %v881
  %v883 = vrot.slane %v802, %v882
  %v884 = vlaneseq
  %v885 = vshrl.u32 %v884, 7
  %v886 = vsub.s32 0, %v885
  %v887 = vrot.slane %v826, %v886
  %v888 = vlaneseq
  %v889 = vshrl.u32 %v888, 7
  %v890 = vsub.s32 0, %v889
  %v891 = vrot.slane %v840, %v890
  %v892 = vlaneseq
  %v893 = vshrl.u32 %v892, 7
  %v894 = vsub.s32 0, %v893
  %v895 = vrot.slane %v848, %v894
  %v896 = vlaneseq
  %v897 = vshrl.u32 %v896, 7
  %v898 = vsub.s32 0, %v897
  %v899 = vrot.slane %v850, %v898
  %v900 = vlaneseq
  %v901 = vshrl.u32 %v900, 7
  %v902 = vsub.s32 0, %v901
  %v903 = vrot.slane %v833, %v902
  %v904 = vlaneseq
  %v905 = vshrl.u32 %v904, 7
  %v906 = vsub.s32 0, %v905
  %v907 = vrot.slane %v847, %v906
  %v908 = vlaneseq
  %v909 = vshrl.u32 %v908, 7
  %v910 = vsub.s32 0, %v909
  %v911 = vrot.slane %v849, %v910
  %v912 = vlaneseq
  %v913 = vshrl.u32 %v912, 7
  %v914 = vsub.s32 0, %v913
  %v915 = vrot.slane %v851, %v914
  %v932 = vmul.f32 %v736, %v855
  %v933 = vmul.f32 %v737, %v859
  %v934 = vmul.f32 %v738, %v863
  %v935 = vmul.f32 %v739, %v867
  %v936 = vmul.f32 %v740, %v871
  %v937 = vmul.f32 %v741, %v875
  %v938 = vmul.f32 %v742, %v879
  %v939 = vmul.f32 %v743, %v883
  %v940 = vmul.f32 %v744, %v887
  %v941 = vmul.f32 %v745, %v891
  %v942 = vmul.f32 %v746, %v895
  %v943 = vmul.f32 %v747, %v899
  %v944 = vmul.f32 %v748, %v903
  %v945 = vmul.f32 %v749, %v907
  %v946 = vmul.f32 %v750, %v911
  %v947 = vmul.f32 %v751, %v915
  %948 = vadd.xlane.f32.xlu0 %v932
  %v949 = vpop.xlane.xlu0 %948
  %950 = vadd.xlane.f32.xlu0 %v933
  %v951 = vpop.xlane.xlu0 %950
  %952 = vadd.xlane.f32.xlu0 %v934
  %v953 = vpop.xlane.xlu0 %952
  %954 = vadd.xlane.f32.xlu0 %v935
  %v955 = vpop.xlane.xlu0 %954
  %956 = vadd.xlane.f32.xlu0 %v936
  %v957 = vpop.xlane.xlu0 %956
  %958 = vadd.xlane.f32.xlu0 %v937
  %v959 = vpop.xlane.xlu0 %958
  %960 = vadd.xlane.f32.xlu0 %v938
  %v961 = vpop.xlane.xlu0 %960
  %962 = vadd.xlane.f32.xlu0 %v939
  %v963 = vpop.xlane.xlu0 %962
  %964 = vadd.xlane.f32.xlu0 %v940
  %v965 = vpop.xlane.xlu0 %964
  %966 = vadd.xlane.f32.xlu0 %v941
  %v967 = vpop.xlane.xlu0 %966
  %968 = vadd.xlane.f32.xlu0 %v942
  %v969 = vpop.xlane.xlu0 %968
  %970 = vadd.xlane.f32.xlu0 %v943
  %v971 = vpop.xlane.xlu0 %970
  %972 = vadd.xlane.f32.xlu0 %v944
  %v973 = vpop.xlane.xlu0 %972
  %974 = vadd.xlane.f32.xlu0 %v945
  %v975 = vpop.xlane.xlu0 %974
  %976 = vadd.xlane.f32.xlu0 %v946
  %v977 = vpop.xlane.xlu0 %976
  %978 = vadd.xlane.f32.xlu0 %v947
  %v979 = vpop.xlane.xlu0 %978
  %v980 = vxor.u32 %v949, 2147483648
  %v981 = vxor.u32 %v951, 2147483648
  %v982 = vxor.u32 %v953, 2147483648
  %v983 = vxor.u32 %v955, 2147483648
  %v984 = vxor.u32 %v957, 2147483648
  %v985 = vxor.u32 %v959, 2147483648
  %v986 = vxor.u32 %v961, 2147483648
  %v987 = vxor.u32 %v963, 2147483648
  %v988 = vxor.u32 %v965, 2147483648
  %v989 = vxor.u32 %v967, 2147483648
  %v990 = vxor.u32 %v969, 2147483648
  %v991 = vxor.u32 %v971, 2147483648
  %v992 = vxor.u32 %v973, 2147483648
  %v993 = vxor.u32 %v975, 2147483648
  %v994 = vxor.u32 %v977, 2147483648
  %v995 = vxor.u32 %v979, 2147483648
  %v996 = vmul.f32 %v980, 1.442695
  %v997 = vpow.pop %v996
  %v998 = vmul.f32 %v981, 1.442695
  %v999 = vpow.pop %v998
  %v1000 = vmul.f32 %v982, 1.442695
  %v1001 = vpow.pop %v1000
  %v1002 = vmul.f32 %v983, 1.442695
  %v1003 = vpow.pop %v1002
  %v1004 = vmul.f32 %v984, 1.442695
  %v1005 = vpow.pop %v1004
  %v1006 = vmul.f32 %v985, 1.442695
  %v1007 = vpow.pop %v1006
  %v1008 = vmul.f32 %v986, 1.442695
  %v1009 = vpow.pop %v1008
  %v1010 = vmul.f32 %v987, 1.442695
  %v1011 = vpow.pop %v1010
  %v1012 = vmul.f32 %v988, 1.442695
  %v1013 = vpow.pop %v1012
  %v1014 = vmul.f32 %v989, 1.442695
  %v1015 = vpow.pop %v1014
  %v1016 = vmul.f32 %v990, 1.442695
  %v1017 = vpow.pop %v1016
  %v1018 = vmul.f32 %v991, 1.442695
  %v1019 = vpow.pop %v1018
  %v1020 = vmul.f32 %v992, 1.442695
  %v1021 = vpow.pop %v1020
  %v1022 = vmul.f32 %v993, 1.442695
  %v1023 = vpow.pop %v1022
  %v1024 = vmul.f32 %v994, 1.442695
  %v1025 = vpow.pop %v1024
  %v1026 = vmul.f32 %v995, 1.442695
  %v1027 = vpow.pop %v1026
  %v1028 = vadd.f32 %v997, 1.0
  %v1029 = vadd.f32 %v999, 1.0
  %v1030 = vadd.f32 %v1001, 1.0
  %v1031 = vadd.f32 %v1003, 1.0
  %v1032 = vadd.f32 %v1005, 1.0
  %v1033 = vadd.f32 %v1007, 1.0
  %v1034 = vadd.f32 %v1009, 1.0
  %v1035 = vadd.f32 %v1011, 1.0
  %v1036 = vadd.f32 %v1013, 1.0
  %v1037 = vadd.f32 %v1015, 1.0
  %v1038 = vadd.f32 %v1017, 1.0
  %v1039 = vadd.f32 %v1019, 1.0
  %v1040 = vadd.f32 %v1021, 1.0
  %v1041 = vadd.f32 %v1023, 1.0
  %v1042 = vadd.f32 %v1025, 1.0
  %v1043 = vadd.f32 %v1027, 1.0
  %v1044 = vrcp.pop %v1028
  %v1045 = vmul.f32 1.0, %v1044
  %v1046 = vrcp.pop %v1029
  %v1047 = vmul.f32 1.0, %v1046
  %v1048 = vrcp.pop %v1030
  %v1049 = vmul.f32 1.0, %v1048
  %v1050 = vrcp.pop %v1031
  %v1051 = vmul.f32 1.0, %v1050
  %v1052 = vrcp.pop %v1032
  %v1053 = vmul.f32 1.0, %v1052
  %v1054 = vrcp.pop %v1033
  %v1055 = vmul.f32 1.0, %v1054
  %v1056 = vrcp.pop %v1034
  %v1057 = vmul.f32 1.0, %v1056
  %v1058 = vrcp.pop %v1035
  %v1059 = vmul.f32 1.0, %v1058
  %v1060 = vrcp.pop %v1036
  %v1061 = vmul.f32 1.0, %v1060
  %v1062 = vrcp.pop %v1037
  %v1063 = vmul.f32 1.0, %v1062
  %v1064 = vrcp.pop %v1038
  %v1065 = vmul.f32 1.0, %v1064
  %v1066 = vrcp.pop %v1039
  %v1067 = vmul.f32 1.0, %v1066
  %v1068 = vrcp.pop %v1040
  %v1069 = vmul.f32 1.0, %v1068
  %v1070 = vrcp.pop %v1041
  %v1071 = vmul.f32 1.0, %v1070
  %v1072 = vrcp.pop %v1042
  %v1073 = vmul.f32 1.0, %v1072
  %v1074 = vrcp.pop %v1043
  %v1075 = vmul.f32 1.0, %v1074
  %v1092 = vlaneseq
  %v1093 = vshrl.u32 %v1092, 7
  %v1094 = vsub.s32 %v64, %v1093
  %v1095 = vrot.slane %v1045, %v1094
  %v1096 = vlaneseq
  %v1097 = vshrl.u32 %v1096, 7
  %v1098 = vsub.s32 %v64, %v1097
  %v1099 = vrot.slane %v1047, %v1098
  %v1100 = vlaneseq
  %v1101 = vshrl.u32 %v1100, 7
  %v1102 = vsub.s32 %v64, %v1101
  %v1103 = vrot.slane %v1049, %v1102
  %v1104 = vlaneseq
  %v1105 = vshrl.u32 %v1104, 7
  %v1106 = vsub.s32 %v64, %v1105
  %v1107 = vrot.slane %v1051, %v1106
  %v1108 = vlaneseq
  %v1109 = vshrl.u32 %v1108, 7
  %v1110 = vsub.s32 %v64, %v1109
  %v1111 = vrot.slane %v1053, %v1110
  %v1112 = vlaneseq
  %v1113 = vshrl.u32 %v1112, 7
  %v1114 = vsub.s32 %v64, %v1113
  %v1115 = vrot.slane %v1055, %v1114
  %v1116 = vlaneseq
  %v1117 = vshrl.u32 %v1116, 7
  %v1118 = vsub.s32 %v64, %v1117
  %v1119 = vrot.slane %v1057, %v1118
  %v1120 = vlaneseq
  %v1121 = vshrl.u32 %v1120, 7
  %v1122 = vsub.s32 %v64, %v1121
  %v1123 = vrot.slane %v1059, %v1122
  %v1124 = vlaneseq
  %v1125 = vshrl.u32 %v1124, 7
  %v1126 = vsub.s32 %v64, %v1125
  %v1127 = vrot.slane %v1061, %v1126
  %v1128 = vlaneseq
  %v1129 = vshrl.u32 %v1128, 7
  %v1130 = vsub.s32 %v64, %v1129
  %v1131 = vrot.slane %v1063, %v1130
  %v1132 = vlaneseq
  %v1133 = vshrl.u32 %v1132, 7
  %v1134 = vsub.s32 %v64, %v1133
  %v1135 = vrot.slane %v1065, %v1134
  %v1136 = vlaneseq
  %v1137 = vshrl.u32 %v1136, 7
  %v1138 = vsub.s32 %v64, %v1137
  %v1139 = vrot.slane %v1067, %v1138
  %v1140 = vlaneseq
  %v1141 = vshrl.u32 %v1140, 7
  %v1142 = vsub.s32 %v64, %v1141
  %v1143 = vrot.slane %v1069, %v1142
  %v1144 = vlaneseq
  %v1145 = vshrl.u32 %v1144, 7
  %v1146 = vsub.s32 %v64, %v1145
  %v1147 = vrot.slane %v1071, %v1146
  %v1148 = vlaneseq
  %v1149 = vshrl.u32 %v1148, 7
  %v1150 = vsub.s32 %v64, %v1149
  %v1151 = vrot.slane %v1073, %v1150
  %v1152 = vlaneseq
  %v1153 = vshrl.u32 %v1152, 7
  %v1154 = vsub.s32 %v64, %v1153
  %v1155 = vrot.slane %v1075, %v1154
  %v1156 = vsel %vm404, %v1099, %v1095
  %v1157 = vsel %vm407, %v1103, %v1156
  %v1158 = vsel %vm410, %v1107, %v1157
  %v1159 = vsel %vm413, %v1111, %v1158
  %v1160 = vsel %vm416, %v1115, %v1159
  %v1161 = vsel %vm419, %v1119, %v1160
  %v1162 = vsel %vm422, %v1123, %v1161
  %v1163 = vsel %vm404, %v1131, %v1127
  %v1164 = vsel %vm407, %v1135, %v1163
  %v1165 = vsel %vm410, %v1139, %v1164
  %v1166 = vsel %vm413, %v1143, %v1165
  %v1167 = vsel %vm416, %v1147, %v1166
  %v1168 = vsel %vm419, %v1151, %v1167
  %v1169 = vsel %vm422, %v1155, %v1168
  %vm1172 = vcmask 64512
  %1173 = vst.msk [vmem:[%s6] sm:$0xff] %vm1172, %v1162
  %1174 = vst.msk [vmem:[%s6 + $0x8] sm:$0xff] %vm1172, %v1169
  // Predicated region
  $region26: #{sisg_forward.1} parent=0 // pred_check
    _
  $region27: #{sisg_forward.1} parent=0 // pred_check_branch
    %1176 = sbr.rel (0) target = $region29
  $region28: #{sisg_forward.1} parent=0 // pred_region
    _
  $region29: #{sisg_forward.1} parent=0 // pred_fallthru
    _
  // Predicated region
  $region30: #{sisg_forward.1} parent=0 // pred_check
    _
  $region31: #{sisg_forward.1} parent=0 // pred_check_branch
    %1178 = sbr.rel (0) target = $region33
  $region32: #{sisg_forward.1} parent=0 // pred_region
    _
  $region33: #{sisg_forward.1} parent=0 // pred_fallthru
    _

</llo_original>
